<compile_context>
chip_gen: v7x
topology: tpu7x:2x2x1
jax: 0.10.0
libtpu: 0.0.40
codegen_flags: <defaults>
</compile_context>

<pallas_src>
import functools

import jax
import jax.numpy as jnp
from jax.experimental import pallas as pl
from jax.experimental.pallas import tpu as pltpu

NUM_NODES = 10
IN_CHANNELS = 3
HIDDEN = 64
OUT_CHANNELS = 2
NUM_LAYERS = 2
SEQ_LEN = 1          # kernel math assumes seq_len == 1 with zero (h0, c0)

# ---- packed weight-slab layout (static offsets, multiples of 16 rows) ----
W_COLS = 3 * HIDDEN                 # 192 lanes (widest matrix: LSTM W_igo)
DC0_W0_R0 = 0                       # rows   0:3    conv0 W0 (3, 64)
DC0_W1_R0 = 16                      # rows  16:19   conv0 W1 (3, 64)
DC1_W0_R0 = 32                      # rows  32:96   conv1 W0 (64, 64)
DC1_W1_R0 = 96                      # rows  96:160  conv1 W1 (64, 64)
L0_R0 = 160                         # rows 160:224  LSTM0 W_igo (64, 192)
L1_R0 = 224                         # rows 224:288  LSTM1 W_igo (64, 192)
OUT_R0 = 288                        # rows 288:352  output W (64, 128-padded)
W_ROWS = 352
B_ROWS = 8                          # bias slab rows (5 used)
OUT_PAD = 128                       # lane-dense output width


# ----------------------------- Pallas kernel ------------------------------ #
def dcrnn_kernel(a_ref, pool_ref, x_ref, w_ref, b_ref, out_ref):
    """Shared body for the single-graph and batched paths.

    a_ref    : (R, R)  row-normalized adjacency (block-diag when batched), bf16
    pool_ref : (P, R)  per-graph mean-pool matrix (rows of 1/N), bf16
    x_ref    : (R, C_in) node features, bf16
    w_ref    : (W_ROWS, W_COLS) packed weight slab, bf16
    b_ref    : (B_ROWS, W_COLS) packed bias slab, bf16
    out_ref  : (P, OUT_PAD) log-probs (2 real lanes + padding), f32
    """
    f32 = jnp.float32
    bf16 = jnp.bfloat16
    H = HIDDEN
    A = a_ref[...]
    x = x_ref[...]

    # ---- diffusion conv 0 + ReLU: x@W0 + (A@x)@W1 + b (no lane concat) ----
    ax = jnp.dot(A, x, preferred_element_type=f32).astype(bf16)
    h = (jnp.dot(x, w_ref[DC0_W0_R0:DC0_W0_R0 + IN_CHANNELS, 0:H],
                 preferred_element_type=f32)
         + jnp.dot(ax, w_ref[DC0_W1_R0:DC0_W1_R0 + IN_CHANNELS, 0:H],
                   preferred_element_type=f32)
         + b_ref[0:1, 0:H])
    h = jnp.maximum(h, 0.0)

    # ---- diffusion conv 1 + ReLU (two K=64 dots, no concat at lane 64) ----
    hb = h.astype(bf16)
    ah = jnp.dot(A, hb, preferred_element_type=f32).astype(bf16)
    h = (jnp.dot(hb, w_ref[DC1_W0_R0:DC1_W0_R0 + H, 0:H],
                 preferred_element_type=f32)
         + jnp.dot(ah, w_ref[DC1_W1_R0:DC1_W1_R0 + H, 0:H],
                   preferred_element_type=f32)
         + b_ref[1:2, 0:H])
    h = jnp.maximum(h, 0.0)

    # ---- stacked LSTMs, seq_len == 1, zero initial state ----
    # Forget gate and W_hh term are dead (c0 == h0 == 0) and were dropped on
    # the host; packed gate order is [i, g, o] with fused bias b_ih + b_hh.
    for r0, brow in ((L0_R0, 2), (L1_R0, 3)):
        gates = (jnp.dot(h.astype(bf16), w_ref[r0:r0 + H, 0:3 * H],
                         preferred_element_type=f32)
                 + b_ref[brow:brow + 1, 0:3 * H])                 # (R, 3H) f32
        i = jax.nn.sigmoid(gates[:, 0:H])
        g = jnp.tanh(gates[:, H:2 * H])
        o = jax.nn.sigmoid(gates[:, 2 * H:3 * H])
        h = o * jnp.tanh(i * g)

    # ---- per-graph mean pool as a matmul (MXU, not a cross-sublane reduce) ----
    pooled = jnp.dot(pool_ref[...], h.astype(bf16),
                     preferred_element_type=f32)                  # (P, H)

    # ---- output head (128-lane padded store) + log_softmax ----
    logits = (jnp.dot(pooled.astype(bf16), w_ref[OUT_R0:OUT_R0 + H, 0:OUT_PAD],
                      preferred_element_type=f32)
              + b_ref[4:5, 0:OUT_PAD])                            # (P, 128)
    # Normalizer over the 2 real classes only; padded lanes are dead weight
    # columns and get sliced off by the wrapper.
    real = logits[:, 0:OUT_CHANNELS]
    m = jnp.max(real, axis=1, keepdims=True)
    lse = m + jnp.log(jnp.sum(jnp.exp(real - m), axis=1, keepdims=True))
    out_ref[...] = logits - lse


# ------------------------------ host wrappers ------------------------------ #
@jax.jit
def dcrnn_forward(a_norm, x, w_slab, b_slab):
    """Single-graph path: no grid, whole arrays resident in VMEM."""
    bf16 = jnp.bfloat16
    pool = jnp.full((1, NUM_NODES), 1.0 / NUM_NODES, jnp.float32).astype(bf16)
    vmem = pl.BlockSpec(memory_space=pltpu.MemorySpace.VMEM)
    out = pl.pallas_call(
        dcrnn_kernel,
        out_shape=jax.ShapeDtypeStruct((1, OUT_PAD), jnp.float32),
        in_specs=[vmem, vmem, vmem, vmem, vmem],
        out_specs=vmem,
    )(a_norm.astype(bf16), pool, x.astype(bf16), w_slab, b_slab)
    return out[:, :OUT_CHANNELS]


@functools.partial(jax.jit, static_argnames=("graphs_per_block",))
def dcrnn_forward_batched(a_norm, x_batched, w_slab, b_slab, *,
                          graphs_per_block=16):
    """Batched path: grid over blocks of G graphs, weight slab VMEM-resident.

    Each grid step runs G independent graphs as one (G*N)-row problem using a
    block-diagonal adjacency and a per-graph pooling matrix.
    # TODO(synk): pad each graph to 16 sublanes (256-row tiles) to exactly
    # fill the v6e/v7x 256-wide MXU; 160 rows is already >128.
    """
    bf16 = jnp.bfloat16
    B, N, C = x_batched.shape
    G = graphs_per_block
    assert B % G == 0, "batch must be divisible by graphs_per_block"

    eye = jnp.eye(G, dtype=jnp.float32)
    a_blk = jnp.kron(eye, a_norm).astype(bf16)                       # (G*N, G*N)
    pool = jnp.kron(eye, jnp.full((1, N), 1.0 / N, jnp.float32)).astype(bf16)
    x_flat = x_batched.reshape(B * N, C).astype(bf16)                # (B*N, C)

    out = pl.pallas_call(
        dcrnn_kernel,
        out_shape=jax.ShapeDtypeStruct((B, OUT_PAD), jnp.float32),
        grid=(B // G,),
        in_specs=[
            pl.BlockSpec((G * N, G * N), lambda b: (0, 0)),   # adjacency, resident
            pl.BlockSpec((G, G * N), lambda b: (0, 0)),       # pooling,   resident
            pl.BlockSpec((G * N, C), lambda b: (b, 0)),       # activations, tiled
            pl.BlockSpec((W_ROWS, W_COLS), lambda b: (0, 0)),  # weights,  resident
            pl.BlockSpec((B_ROWS, W_COLS), lambda b: (0, 0)),  # biases,   resident
        ],
        out_specs=pl.BlockSpec((G, OUT_PAD), lambda b: (b, 0)),
        compiler_params=pltpu.CompilerParams(
            dimension_semantics=("parallel",)),
    )(a_blk, pool, x_flat, w_slab, b_slab)
    return out[:, :OUT_CHANNELS]


# -------------------------- parameter construction ------------------------ #
def make_raw_params(key):
    """PyTorch-layout parameters (full LSTM with f-gate and W_hh)."""
    ks = list(jax.random.split(key, 16))
    it = iter(ks)
    s = 0.1

    def nrm(shape):
        return (s * jax.random.normal(next(it), shape)).astype(jnp.float32)

    dconv = []
    cin = IN_CHANNELS
    for _ in range(NUM_LAYERS):
        dconv.append(dict(w0=nrm((cin, HIDDEN)), w1=nrm((cin, HIDDEN)),
                          b=nrm((HIDDEN,))))
        cin = HIDDEN
    lstm = []
    for _ in range(NUM_LAYERS):
        lstm.append(dict(wih=nrm((4 * HIDDEN, HIDDEN)),
                         whh=nrm((4 * HIDDEN, HIDDEN)),
                         bih=nrm((4 * HIDDEN,)), bhh=nrm((4 * HIDDEN,))))
    wout = nrm((OUT_CHANNELS, HIDDEN))
    bout = nrm((OUT_CHANNELS,))
    return dict(dconv=dconv, lstm=lstm, wout=wout, bout=bout)


def pack_params(raw):
    """Pack all weights/biases into two bf16 slabs (done once on the host).

    Drops the LSTM forget gate and W_hh terms — valid only because the module
    forward uses seq_len == SEQ_LEN == 1 with zero initial (h0, c0).
    """
    assert SEQ_LEN == 1, "packed LSTM weights assume seq_len == 1, zero state"
    H = HIDDEN
    w = jnp.zeros((W_ROWS, W_COLS), jnp.float32)
    b = jnp.zeros((B_ROWS, W_COLS), jnp.float32)

    # diffusion convs (W0 / W1 at 16-row-aligned offsets)
    w = w.at[DC0_W0_R0:DC0_W0_R0 + IN_CHANNELS, 0:H].set(raw["dconv"][0]["w0"])
    w = w.at[DC0_W1_R0:DC0_W1_R0 + IN_CHANNELS, 0:H].set(raw["dconv"][0]["w1"])
    b = b.at[0, 0:H].set(raw["dconv"][0]["b"])
    w = w.at[DC1_W0_R0:DC1_W0_R0 + H, 0:H].set(raw["dconv"][1]["w0"])
    w = w.at[DC1_W1_R0:DC1_W1_R0 + H, 0:H].set(raw["dconv"][1]["w1"])
    b = b.at[1, 0:H].set(raw["dconv"][1]["b"])

    # LSTMs: drop dead f-gate / W_hh, fuse biases, pre-transpose to (H, 3H)
    for idx, (r0, brow) in enumerate(((L0_R0, 2), (L1_R0, 3))):
        lyr = raw["lstm"][idx]
        wih, b_full = lyr["wih"], lyr["bih"] + lyr["bhh"]
        w_igo = jnp.concatenate(
            [wih[0:H], wih[2 * H:3 * H], wih[3 * H:4 * H]], axis=0).T   # (H, 3H)
        b_igo = jnp.concatenate(
            [b_full[0:H], b_full[2 * H:3 * H], b_full[3 * H:4 * H]])    # (3H,)
        w = w.at[r0:r0 + H, 0:3 * H].set(w_igo)
        b = b.at[brow, 0:3 * H].set(b_igo)

    # output head: real classes in lanes 0:2, remaining lanes stay zero
    w = w.at[OUT_R0:OUT_R0 + H, 0:OUT_CHANNELS].set(raw["wout"].T)
    b = b.at[4, 0:OUT_CHANNELS].set(raw["bout"])
    return w.astype(jnp.bfloat16), b.astype(jnp.bfloat16)


def make_adjacency(edge_index, num_nodes):
    src, dst = edge_index
    A = jnp.zeros((num_nodes, num_nodes), jnp.float32).at[dst, src].set(1.0)
    deg = jnp.sum(A, axis=1, keepdims=True)
    return A / jnp.maximum(deg, 1.0)


def reference_forward(a_norm, x, raw):
    """Pure-JAX f32 reference with the FULL module math (f-gate, W_hh, zero state)."""
    H = HIDDEN
    h = x
    for lyr in raw["dconv"]:
        h = jnp.maximum(h @ lyr["w0"] + (a_norm @ h) @ lyr["w1"] + lyr["b"], 0.0)
    for lyr in raw["lstm"]:
        h0 = jnp.zeros((h.shape[0], H), jnp.float32)
        c0 = jnp.zeros((h.shape[0], H), jnp.float32)
        gates = h @ lyr["wih"].T + h0 @ lyr["whh"].T + lyr["bih"] + lyr["bhh"]
        i = jax.nn.sigmoid(gates[:, 0:H])
        f = jax.nn.sigmoid(gates[:, H:2 * H])
        g = jnp.tanh(gates[:, 2 * H:3 * H])
        o = jax.nn.sigmoid(gates[:, 3 * H:4 * H])
        c = f * c0 + i * g
        h = o * jnp.tanh(c)
    pooled = jnp.mean(h, axis=0, keepdims=True)
    logits = pooled @ raw["wout"].T + raw["bout"]
    return jax.nn.log_softmax(logits, axis=1)


if __name__ == "__main__":
    key = jax.random.PRNGKey(0)
    kx, kp, kb = jax.random.split(key, 3)

    edge_index = jnp.array(
        [[0, 1, 2, 3, 4, 5, 6, 7, 8, 9],
         [1, 2, 3, 4, 5, 6, 7, 8, 9, 0]], dtype=jnp.int32)
    a_norm = make_adjacency(edge_index, NUM_NODES)

    raw = make_raw_params(kp)
    w_slab, b_slab = pack_params(raw)

    # --- single-graph path (matches the module forward exactly) ---
    x = jax.random.normal(kx, (NUM_NODES, IN_CHANNELS), jnp.float32)
    out1 = jax.block_until_ready(dcrnn_forward(a_norm, x, w_slab, b_slab))
    ref1 = reference_forward(a_norm, x, raw)
    assert out1.shape == (1, OUT_CHANNELS)
    assert jnp.allclose(out1, ref1, atol=3e-2, rtol=3e-2), (out1, ref1)

    # --- batched path: 32 graphs, 16 per grid step, parallel batch axis ---
    B = 32
    xb = jax.random.normal(kb, (B, NUM_NODES, IN_CHANNELS), jnp.float32)
    outb = jax.block_until_ready(
        dcrnn_forward_batched(a_norm, xb, w_slab, b_slab, graphs_per_block=16))
    refb = jax.vmap(lambda xi: reference_forward(a_norm, xi, raw)[0])(xb)
    assert outb.shape == (B, OUT_CHANNELS)
    assert jnp.allclose(outb, refb, atol=3e-2, rtol=3e-2), (outb, refb)

    print("KERNEL_OK")
</pallas_src>

<mosaic_0001>
module attributes {stable_mosaic.version = 11 : i64} {
  func.func @dcrnn_kernel(%arg0: memref<10x10xbf16, #tpu.memory_space<vmem>>, %arg1: memref<1x10xbf16, #tpu.memory_space<vmem>>, %arg2: memref<10x3xbf16, #tpu.memory_space<vmem>>, %arg3: memref<352x192xbf16, #tpu.memory_space<vmem>>, %arg4: memref<8x192xbf16, #tpu.memory_space<vmem>>, %arg5: memref<1x128xf32, #tpu.memory_space<vmem>>) attributes {dimension_semantics = [], scalar_prefetch = 0 : i64, scratch_operands = 0 : i64, tpu.core_type = #tpu.core_type<tc>} {
    %c0 = arith.constant 0 : index
    %c0_0 = arith.constant 0 : index
    %0 = vector.load %arg0[%c0, %c0_0] : memref<10x10xbf16, #tpu.memory_space<vmem>>, vector<10x10xbf16>
    %c0_1 = arith.constant 0 : index
    %c0_2 = arith.constant 0 : index
    %1 = vector.load %arg2[%c0_1, %c0_2] : memref<10x3xbf16, #tpu.memory_space<vmem>>, vector<10x3xbf16>
    %cst = arith.constant dense<0.000000e+00> : vector<10x3xf32>
    %2 = tpu.matmul %0, %1, %cst {dimension_numbers = #tpu.dot_dimension_numbers<[1], [0], [0], [1], [0, 0, 1, 1], [], []>} : vector<10x10xbf16>, vector<10x3xbf16>, vector<10x3xf32> -> vector<10x3xf32>
    %3 = arith.truncf %2 : vector<10x3xf32> to vector<10x3xbf16>
    %c0_3 = arith.constant 0 : index
    %c0_4 = arith.constant 0 : index
    %4 = vector.load %arg3[%c0_3, %c0_4] : memref<352x192xbf16, #tpu.memory_space<vmem>>, vector<3x64xbf16>
    %cst_5 = arith.constant dense<0.000000e+00> : vector<10x64xf32>
    %5 = tpu.matmul %1, %4, %cst_5 {dimension_numbers = #tpu.dot_dimension_numbers<[1], [0], [0], [1], [0, 0, 1, 1], [], []>} : vector<10x3xbf16>, vector<3x64xbf16>, vector<10x64xf32> -> vector<10x64xf32>
    %c16 = arith.constant 16 : index
    %c0_6 = arith.constant 0 : index
    %6 = vector.load %arg3[%c16, %c0_6] : memref<352x192xbf16, #tpu.memory_space<vmem>>, vector<3x64xbf16>
    %cst_7 = arith.constant dense<0.000000e+00> : vector<10x64xf32>
    %7 = tpu.matmul %3, %6, %cst_7 {dimension_numbers = #tpu.dot_dimension_numbers<[1], [0], [0], [1], [0, 0, 1, 1], [], []>} : vector<10x3xbf16>, vector<3x64xbf16>, vector<10x64xf32> -> vector<10x64xf32>
    %8 = arith.addf %5, %7 : vector<10x64xf32>
    %c0_8 = arith.constant 0 : index
    %c0_9 = arith.constant 0 : index
    %9 = vector.load %arg4[%c0_8, %c0_9] : memref<8x192xbf16, #tpu.memory_space<vmem>>, vector<1x64xbf16>
    %10 = arith.extf %9 : vector<1x64xbf16> to vector<1x64xf32>
    %11 = vector.broadcast %10 : vector<1x64xf32> to vector<10x64xf32>
    %12 = arith.addf %8, %11 : vector<10x64xf32>
    %cst_10 = arith.constant 0.000000e+00 : f32
    %13 = vector.broadcast %cst_10 : f32 to vector<10x64xf32>
    %14 = arith.maximumf %12, %13 : vector<10x64xf32>
    %15 = arith.truncf %14 : vector<10x64xf32> to vector<10x64xbf16>
    %cst_11 = arith.constant dense<0.000000e+00> : vector<10x64xf32>
    %16 = tpu.matmul %0, %15, %cst_11 {dimension_numbers = #tpu.dot_dimension_numbers<[1], [0], [0], [1], [0, 0, 1, 1], [], []>} : vector<10x10xbf16>, vector<10x64xbf16>, vector<10x64xf32> -> vector<10x64xf32>
    %17 = arith.truncf %16 : vector<10x64xf32> to vector<10x64xbf16>
    %c32 = arith.constant 32 : index
    %c0_12 = arith.constant 0 : index
    %18 = vector.load %arg3[%c32, %c0_12] : memref<352x192xbf16, #tpu.memory_space<vmem>>, vector<64x64xbf16>
    %cst_13 = arith.constant dense<0.000000e+00> : vector<10x64xf32>
    %19 = tpu.matmul %15, %18, %cst_13 {dimension_numbers = #tpu.dot_dimension_numbers<[1], [0], [0], [1], [0, 0, 1, 1], [], []>} : vector<10x64xbf16>, vector<64x64xbf16>, vector<10x64xf32> -> vector<10x64xf32>
    %c96 = arith.constant 96 : index
    %c0_14 = arith.constant 0 : index
    %20 = vector.load %arg3[%c96, %c0_14] : memref<352x192xbf16, #tpu.memory_space<vmem>>, vector<64x64xbf16>
    %cst_15 = arith.constant dense<0.000000e+00> : vector<10x64xf32>
    %21 = tpu.matmul %17, %20, %cst_15 {dimension_numbers = #tpu.dot_dimension_numbers<[1], [0], [0], [1], [0, 0, 1, 1], [], []>} : vector<10x64xbf16>, vector<64x64xbf16>, vector<10x64xf32> -> vector<10x64xf32>
    %22 = arith.addf %19, %21 : vector<10x64xf32>
    %c1 = arith.constant 1 : index
    %c0_16 = arith.constant 0 : index
    %23 = vector.load %arg4[%c1, %c0_16] : memref<8x192xbf16, #tpu.memory_space<vmem>>, vector<1x64xbf16>
    %24 = arith.extf %23 : vector<1x64xbf16> to vector<1x64xf32>
    %25 = vector.broadcast %24 : vector<1x64xf32> to vector<10x64xf32>
    %26 = arith.addf %22, %25 : vector<10x64xf32>
    %cst_17 = arith.constant 0.000000e+00 : f32
    %27 = vector.broadcast %cst_17 : f32 to vector<10x64xf32>
    %28 = arith.maximumf %26, %27 : vector<10x64xf32>
    %29 = arith.truncf %28 : vector<10x64xf32> to vector<10x64xbf16>
    %c160 = arith.constant 160 : index
    %c0_18 = arith.constant 0 : index
    %30 = vector.load %arg3[%c160, %c0_18] : memref<352x192xbf16, #tpu.memory_space<vmem>>, vector<64x192xbf16>
    %cst_19 = arith.constant dense<0.000000e+00> : vector<10x192xf32>
    %31 = tpu.matmul %29, %30, %cst_19 {dimension_numbers = #tpu.dot_dimension_numbers<[1], [0], [0], [1], [0, 0, 1, 1], [], []>} : vector<10x64xbf16>, vector<64x192xbf16>, vector<10x192xf32> -> vector<10x192xf32>
    %c2 = arith.constant 2 : index
    %c0_20 = arith.constant 0 : index
    %32 = vector.load %arg4[%c2, %c0_20] : memref<8x192xbf16, #tpu.memory_space<vmem>>, vector<1x192xbf16>
    %33 = arith.extf %32 : vector<1x192xbf16> to vector<1x192xf32>
    %34 = vector.broadcast %33 : vector<1x192xf32> to vector<10x192xf32>
    %35 = arith.addf %31, %34 : vector<10x192xf32>
    %36 = vector.extract_strided_slice %35 {offsets = [0, 0], sizes = [10, 64], strides = [1, 1]} : vector<10x192xf32> to vector<10x64xf32>
    %37 = arith.negf %36 : vector<10x64xf32>
    %38 = math.exp %37 : vector<10x64xf32>
    %cst_21 = arith.constant 1.000000e+00 : f32
    %39 = vector.broadcast %cst_21 : f32 to vector<10x64xf32>
    %40 = arith.addf %39, %38 : vector<10x64xf32>
    %41 = arith.divf %39, %40 : vector<10x64xf32>
    %42 = vector.extract_strided_slice %35 {offsets = [0, 64], sizes = [10, 64], strides = [1, 1]} : vector<10x192xf32> to vector<10x64xf32>
    %43 = math.tanh %42 : vector<10x64xf32>
    %44 = vector.extract_strided_slice %35 {offsets = [0, 128], sizes = [10, 64], strides = [1, 1]} : vector<10x192xf32> to vector<10x64xf32>
    %45 = arith.negf %44 : vector<10x64xf32>
    %46 = math.exp %45 : vector<10x64xf32>
    %cst_22 = arith.constant 1.000000e+00 : f32
    %47 = vector.broadcast %cst_22 : f32 to vector<10x64xf32>
    %48 = arith.addf %47, %46 : vector<10x64xf32>
    %49 = arith.divf %47, %48 : vector<10x64xf32>
    %50 = arith.mulf %41, %43 : vector<10x64xf32>
    %51 = math.tanh %50 : vector<10x64xf32>
    %52 = arith.mulf %49, %51 : vector<10x64xf32>
    %53 = arith.truncf %52 : vector<10x64xf32> to vector<10x64xbf16>
    %c224 = arith.constant 224 : index
    %c0_23 = arith.constant 0 : index
    %54 = vector.load %arg3[%c224, %c0_23] : memref<352x192xbf16, #tpu.memory_space<vmem>>, vector<64x192xbf16>
    %cst_24 = arith.constant dense<0.000000e+00> : vector<10x192xf32>
    %55 = tpu.matmul %53, %54, %cst_24 {dimension_numbers = #tpu.dot_dimension_numbers<[1], [0], [0], [1], [0, 0, 1, 1], [], []>} : vector<10x64xbf16>, vector<64x192xbf16>, vector<10x192xf32> -> vector<10x192xf32>
    %c3 = arith.constant 3 : index
    %c0_25 = arith.constant 0 : index
    %56 = vector.load %arg4[%c3, %c0_25] : memref<8x192xbf16, #tpu.memory_space<vmem>>, vector<1x192xbf16>
    %57 = arith.extf %56 : vector<1x192xbf16> to vector<1x192xf32>
    %58 = vector.broadcast %57 : vector<1x192xf32> to vector<10x192xf32>
    %59 = arith.addf %55, %58 : vector<10x192xf32>
    %60 = vector.extract_strided_slice %59 {offsets = [0, 0], sizes = [10, 64], strides = [1, 1]} : vector<10x192xf32> to vector<10x64xf32>
    %61 = arith.negf %60 : vector<10x64xf32>
    %62 = math.exp %61 : vector<10x64xf32>
    %cst_26 = arith.constant 1.000000e+00 : f32
    %63 = vector.broadcast %cst_26 : f32 to vector<10x64xf32>
    %64 = arith.addf %63, %62 : vector<10x64xf32>
    %65 = arith.divf %63, %64 : vector<10x64xf32>
    %66 = vector.extract_strided_slice %59 {offsets = [0, 64], sizes = [10, 64], strides = [1, 1]} : vector<10x192xf32> to vector<10x64xf32>
    %67 = math.tanh %66 : vector<10x64xf32>
    %68 = vector.extract_strided_slice %59 {offsets = [0, 128], sizes = [10, 64], strides = [1, 1]} : vector<10x192xf32> to vector<10x64xf32>
    %69 = arith.negf %68 : vector<10x64xf32>
    %70 = math.exp %69 : vector<10x64xf32>
    %cst_27 = arith.constant 1.000000e+00 : f32
    %71 = vector.broadcast %cst_27 : f32 to vector<10x64xf32>
    %72 = arith.addf %71, %70 : vector<10x64xf32>
    %73 = arith.divf %71, %72 : vector<10x64xf32>
    %74 = arith.mulf %65, %67 : vector<10x64xf32>
    %75 = math.tanh %74 : vector<10x64xf32>
    %76 = arith.mulf %73, %75 : vector<10x64xf32>
    %c0_28 = arith.constant 0 : index
    %c0_29 = arith.constant 0 : index
    %77 = vector.load %arg1[%c0_28, %c0_29] : memref<1x10xbf16, #tpu.memory_space<vmem>>, vector<1x10xbf16>
    %78 = arith.truncf %76 : vector<10x64xf32> to vector<10x64xbf16>
    %cst_30 = arith.constant dense<0.000000e+00> : vector<1x64xf32>
    %79 = tpu.matmul %77, %78, %cst_30 {dimension_numbers = #tpu.dot_dimension_numbers<[1], [0], [0], [1], [0, 0, 1, 1], [], []>} : vector<1x10xbf16>, vector<10x64xbf16>, vector<1x64xf32> -> vector<1x64xf32>
    %80 = arith.truncf %79 : vector<1x64xf32> to vector<1x64xbf16>
    %c288 = arith.constant 288 : index
    %c0_31 = arith.constant 0 : index
    %81 = vector.load %arg3[%c288, %c0_31] : memref<352x192xbf16, #tpu.memory_space<vmem>>, vector<64x128xbf16>
    %cst_32 = arith.constant dense<0.000000e+00> : vector<1x128xf32>
    %82 = tpu.matmul %80, %81, %cst_32 {dimension_numbers = #tpu.dot_dimension_numbers<[1], [0], [0], [1], [0, 0, 1, 1], [], []>} : vector<1x64xbf16>, vector<64x128xbf16>, vector<1x128xf32> -> vector<1x128xf32>
    %c4 = arith.constant 4 : index
    %c0_33 = arith.constant 0 : index
    %83 = vector.load %arg4[%c4, %c0_33] : memref<8x192xbf16, #tpu.memory_space<vmem>>, vector<1x128xbf16>
    %84 = arith.extf %83 : vector<1x128xbf16> to vector<1x128xf32>
    %85 = arith.addf %82, %84 : vector<1x128xf32>
    %86 = vector.extract_strided_slice %85 {offsets = [0, 0], sizes = [1, 2], strides = [1, 1]} : vector<1x128xf32> to vector<1x2xf32>
    %cst_34 = arith.constant dense<0xFF800000> : vector<1xf32>
    %87 = vector.multi_reduction <maximumf>, %86, %cst_34 [1] : vector<1x2xf32> to vector<1xf32>
    %88 = vector.shape_cast %87 : vector<1xf32> to vector<1x1xf32>
    %89 = vector.broadcast %88 : vector<1x1xf32> to vector<1x2xf32>
    %90 = arith.subf %86, %89 : vector<1x2xf32>
    %91 = math.exp %90 : vector<1x2xf32>
    %cst_35 = arith.constant dense<0.000000e+00> : vector<1xf32>
    %92 = vector.multi_reduction <add>, %91, %cst_35 [1] : vector<1x2xf32> to vector<1xf32>
    %93 = vector.shape_cast %92 : vector<1xf32> to vector<1x1xf32>
    %94 = math.log %93 : vector<1x1xf32>
    %95 = arith.addf %88, %94 : vector<1x1xf32>
    %96 = vector.broadcast %95 : vector<1x1xf32> to vector<1x128xf32>
    %97 = arith.subf %85, %96 : vector<1x128xf32>
    %c0_36 = arith.constant 0 : index
    %c0_37 = arith.constant 0 : index
    %98 = vector.load %arg5[%c0_36, %c0_37] : memref<1x128xf32, #tpu.memory_space<vmem>>, vector<1x128xf32>
    tpu.vector_store %arg5[%c0_36, %c0_37], %97 {strides = array<i32>} : memref<1x128xf32, #tpu.memory_space<vmem>>, vector<1x128xf32>,
    return
  }
}

</mosaic_0001>

<llo_original>
// kernel: dcrnn_forward.1
$region0: #{dcrnn_forward.1}
  #allocation0 [shape = 'u32[]', space=smem, size = 0x4, offset = 0x4, fixed_abs, tag = 'smem constant byte address 0x4 - core index']
  #allocation1 [shape = 'u32[144,128]{1,0:T(1,128)}', space=vmem, size = 0x12000, scoped, tag = 'internal scratch']
  %s0 = inlined_call_operand.vmem [shape: bf16[10,10], index: 0, kind: input, shape index: {}]
  %s1 = inlined_call_operand.vmem [shape: bf16[1,10], index: 1, kind: input, shape index: {}]
  %s2 = inlined_call_operand.vmem [shape: bf16[10,3], index: 2, kind: input, shape index: {}]
  %s3 = inlined_call_operand.vmem [shape: bf16[352,192], index: 3, kind: input, shape index: {}]
  %s4 = inlined_call_operand.vmem [shape: bf16[8,192], index: 4, kind: input, shape index: {}]
  %s5 = inlined_call_operand.hbm [shape: f32[1,128], index: 5, kind: output, shape index: {}]
  %s6 = sld [smem:[#allocation0]]
  $region30: #{dcrnn_forward.1} parent=0
    _
  %s8 = ssub.s32 1, %s6
  %s9 = scalar_select 0, %s8, %s6
  $region1: #{dcrnn_forward.1} parent=0
    #allocation2 [shape = 'u8[512]{0}', space=vmem, size = 0x400, scoped, tag = 'output window, operand 0, single buffered']
    #allocation3 [shape = 's32[1]{0}', space=sflag, size = 0x4, scoped, tag = 'scoped memory for dcrnn_forward.1']
    %10 = vsyncpa [#allocation3], 0
    // Predicated region
    $region2: #{dcrnn_forward.1} parent=1 // pred_check
      _
    $region3: #{dcrnn_forward.1} parent=1 // pred_check_branch
      %12 = sbr.rel (0) target = $region5
    $region4: #{dcrnn_forward.1} parent=1 // pred_region
      _
    $region5: #{dcrnn_forward.1} parent=1 // pred_fallthru
      _
    // Predicated region
    $region6: #{dcrnn_forward.1} parent=1 // pred_check
      _
    $region7: #{dcrnn_forward.1} parent=1 // pred_check_branch
      %14 = sbr.rel (0) target = $region9
    $region8: #{dcrnn_forward.1} parent=1 // pred_region
      _
    $region9: #{dcrnn_forward.1} parent=1 // pred_fallthru
      _
    // Predicated region
    $region10: #{dcrnn_forward.1} parent=1 // pred_check
      _
    $region11: #{dcrnn_forward.1} parent=1 // pred_check_branch
      %16 = sbr.rel (0) target = $region13
    $region12: #{dcrnn_forward.1} parent=1 // pred_region
      _
    $region13: #{dcrnn_forward.1} parent=1 // pred_fallthru
      _
    // Predicated region
    $region14: #{dcrnn_forward.1} parent=1 // pred_check
      _
    $region15: #{dcrnn_forward.1} parent=1 // pred_check_branch
      %18 = sbr.rel (0) target = $region17
    $region16: #{dcrnn_forward.1} parent=1 // pred_region
      _
    $region17: #{dcrnn_forward.1} parent=1 // pred_fallthru
      _
    // Predicated region
    $region18: #{dcrnn_forward.1} parent=1 // pred_check
      _
    $region19: #{dcrnn_forward.1} parent=1 // pred_check_branch
      %20 = sbr.rel (0) target = $region21
    $region20: #{dcrnn_forward.1} parent=1 // pred_region
      _
    $region21: #{dcrnn_forward.1} parent=1 // pred_fallthru
      _
    %v22 = vld [vmem:[%s0] sm:$0xf]
    %v23 = vld [vmem:[%s0 + $0x4] sm:$0x1]
    %v24 = vld [vmem:[%s2] sm:$0xf]
    %v25 = vld [vmem:[%s2 + $0x4] sm:$0x1]
    %v28 = vunpack.c.l.b16 %v22
    %v29 = vunpack.c.l.b16 %v23
    %v30 = vpack.c.b16 %v29, %v28
    %v33 = vunpack.c.l.b16 %v24
    %v34 = vunpack.c.l.b16 %v25
    %v35 = vpack.c.b16 %v34, %v33
    %vm36 = vcmask 80896
    %v38 = vsel %vm36, %v30, 0
    %vm40 = vcmask 1044480
    %v42 = vsel %vm40, %v35, 0
    %44 = vmatprep.subr.bf16.mxu0 0
    %45 = vmatpush1.bf16.msra.mxu0 %v42
    %46 = vmatprep.subr.bf16.mxu0 0
    %47 = vmatpush1.bf16.msra.mxu0 0
    %48 = vmatprep.subr.bf16.mxu0 0
    %49 = vmatpush1.bf16.msra.mxu0 0
    %50 = vmatprep.subr.bf16.mxu0 0
    %51 = vmatpush1.bf16.msra.mxu0 0
    %52 = vmatprep.subr.bf16.mxu0 0
    %53 = vmatpush1.bf16.msra.mxu0 0
    %54 = vmatprep.subr.bf16.mxu0 0
    %55 = vmatpush1.bf16.msra.mxu0 0
    %56 = vmatprep.subr.bf16.mxu0 0
    %57 = vmatpush1.bf16.msra.mxu0 0
    %58 = vmatprep.subr.bf16.mxu0 0
    %59 = vmatpush1.bf16.msra.mxu0 0
    %60 = vmatprep.subr.bf16.mxu0 0
    %61 = vmatpush1.bf16.msra.mxu0 0
    %62 = vmatprep.subr.bf16.mxu0 0
    %63 = vmatpush1.bf16.msra.mxu0 0
    %64 = vmatprep.subr.bf16.mxu0 0
    %65 = vmatpush1.bf16.msra.mxu0 0
    %66 = vmatprep.subr.bf16.mxu0 0
    %67 = vmatpush1.bf16.msra.mxu0 0
    %68 = vmatprep.subr.bf16.mxu0 0
    %69 = vmatpush1.bf16.msra.mxu0 0
    %70 = vmatprep.subr.bf16.mxu0 0
    %71 = vmatpush1.bf16.msra.mxu0 0
    %72 = vmatprep.subr.bf16.mxu0 0
    %73 = vmatpush1.bf16.msra.mxu0 0
    %74 = vmatprep.subr.bf16.mxu0 0
    %75 = vmatpush1.bf16.msra.mxu0 0
    %76 = vmatprep.mubr.bf16.mxu0 0
    %77 = vmatmul.mubr.bf16.gmra.mrb[0].mxu0 %v38
    %v78 = vpop.f32.mrb[0].mxu0
    %v79 = vadd.f32 0.0, %v78
    %v80 = vpop.f32.mrb[0].mxu0
    %v81 = vpop.f32.mrb[0].mxu0
    %v82 = vadd.f32 0.0, %v81
    %v83 = vpop.f32.mrb[0].mxu0
    %84 = vdwg.mxu0
    %v85 = vpack.c.bf16 %v82, %v79
    %v86 = vld [vmem:[%s3] sm:$0x3]
    %v87 = vld [vmem:[%s3 + $0x10] sm:$0x3]
    %vm88 = vcmask 23552
    %v90 = vsel %vm88, %v85, 0
    %vm92 = vcmask 1040384
    %vm93 = vcmask 1041408
    %v94 = vsel %vm92, 4294967295, 65535
    %v95 = vsel %vm93, %v94, 0
    %v97 = vand.u32 %v87, %v95
    %99 = vmatprep.subr.bf16.mxu0 0
    %100 = vmatpush1.bf16.msra.mxu0 %v97
    %101 = vmatprep.subr.bf16.mxu0 0
    %102 = vmatpush1.bf16.msra.mxu0 0
    %103 = vmatprep.subr.bf16.mxu0 0
    %104 = vmatpush1.bf16.msra.mxu0 0
    %105 = vmatprep.subr.bf16.mxu0 0
    %106 = vmatpush1.bf16.msra.mxu0 0
    %107 = vmatprep.subr.bf16.mxu0 0
    %108 = vmatpush1.bf16.msra.mxu0 0
    %109 = vmatprep.subr.bf16.mxu0 0
    %110 = vmatpush1.bf16.msra.mxu0 0
    %111 = vmatprep.subr.bf16.mxu0 0
    %112 = vmatpush1.bf16.msra.mxu0 0
    %113 = vmatprep.subr.bf16.mxu0 0
    %114 = vmatpush1.bf16.msra.mxu0 0
    %115 = vmatprep.subr.bf16.mxu0 0
    %116 = vmatpush1.bf16.msra.mxu0 0
    %117 = vmatprep.subr.bf16.mxu0 0
    %118 = vmatpush1.bf16.msra.mxu0 0
    %119 = vmatprep.subr.bf16.mxu0 0
    %120 = vmatpush1.bf16.msra.mxu0 0
    %121 = vmatprep.subr.bf16.mxu0 0
    %122 = vmatpush1.bf16.msra.mxu0 0
    %123 = vmatprep.subr.bf16.mxu0 0
    %124 = vmatpush1.bf16.msra.mxu0 0
    %125 = vmatprep.subr.bf16.mxu0 0
    %126 = vmatpush1.bf16.msra.mxu0 0
    %127 = vmatprep.subr.bf16.mxu0 0
    %128 = vmatpush1.bf16.msra.mxu0 0
    %129 = vmatprep.subr.bf16.mxu0 0
    %130 = vmatpush1.bf16.msra.mxu0 0
    %131 = vmatprep.mubr.bf16.mxu0 0
    %132 = vmatmul.mubr.bf16.gmra.mrb[0].mxu0 %v90
    %v133 = vpop.f32.mrb[0].mxu0
    %v134 = vadd.f32 0.0, %v133
    %v135 = vpop.f32.mrb[0].mxu0
    %v136 = vpop.f32.mrb[0].mxu0
    %v137 = vadd.f32 0.0, %v136
    %v138 = vpop.f32.mrb[0].mxu0
    %139 = vdwg.mxu0
    %v140 = vsel %vm88, %v35, 0
    %v143 = vand.u32 %v86, %v95
    %145 = vmatprep.subr.bf16.mxu0 0
    %146 = vmatpush1.bf16.msra.mxu0 %v143
    %147 = vmatprep.subr.bf16.mxu0 0
    %148 = vmatpush1.bf16.msra.mxu0 0
    %149 = vmatprep.subr.bf16.mxu0 0
    %150 = vmatpush1.bf16.msra.mxu0 0
    %151 = vmatprep.subr.bf16.mxu0 0
    %152 = vmatpush1.bf16.msra.mxu0 0
    %153 = vmatprep.subr.bf16.mxu0 0
    %154 = vmatpush1.bf16.msra.mxu0 0
    %155 = vmatprep.subr.bf16.mxu0 0
    %156 = vmatpush1.bf16.msra.mxu0 0
    %157 = vmatprep.subr.bf16.mxu0 0
    %158 = vmatpush1.bf16.msra.mxu0 0
    %159 = vmatprep.subr.bf16.mxu0 0
    %160 = vmatpush1.bf16.msra.mxu0 0
    %161 = vmatprep.subr.bf16.mxu0 0
    %162 = vmatpush1.bf16.msra.mxu0 0
    %163 = vmatprep.subr.bf16.mxu0 0
    %164 = vmatpush1.bf16.msra.mxu0 0
    %165 = vmatprep.subr.bf16.mxu0 0
    %166 = vmatpush1.bf16.msra.mxu0 0
    %167 = vmatprep.subr.bf16.mxu0 0
    %168 = vmatpush1.bf16.msra.mxu0 0
    %169 = vmatprep.subr.bf16.mxu0 0
    %170 = vmatpush1.bf16.msra.mxu0 0
    %171 = vmatprep.subr.bf16.mxu0 0
    %172 = vmatpush1.bf16.msra.mxu0 0
    %173 = vmatprep.subr.bf16.mxu0 0
    %174 = vmatpush1.bf16.msra.mxu0 0
    %175 = vmatprep.subr.bf16.mxu0 0
    %176 = vmatpush1.bf16.msra.mxu0 0
    %177 = vmatprep.mubr.bf16.mxu0 0
    %178 = vmatmul.mubr.bf16.gmra.mrb[0].mxu0 %v140
    %v179 = vpop.f32.mrb[0].mxu0
    %v180 = vadd.f32 %v134, %v179
    %v181 = vpop.f32.mrb[0].mxu0
    %v182 = vpop.f32.mrb[0].mxu0
    %v183 = vadd.f32 %v137, %v182
    %v184 = vpop.f32.mrb[0].mxu0
    %185 = vdwg.mxu0
    %v186 = vld [vmem:[%s4] sm:$0x1]
    %v187 = vunpack.c.l.bf16 %v186
    %v188 = vlaneseq
    %v189 = vshrl.u32 %v188, 7
    %v190 = vsub.s32 0, %v189
    %v191 = vrot.slane %v187, %v190
    %v192 = vadd.f32 %v180, %v191
    %v193 = vadd.f32 %v183, %v191
    %v194 = vmax.f32 %v192, 0.0
    %v195 = vmax.f32 %v193, 0.0
    %v196 = vpack.c.bf16 %v195, %v194
    %v198 = vsel %vm40, %v196, 0
    %200 = vmatprep.subr.bf16.mxu0 0
    %201 = vmatpush1.bf16.msra.mxu0 %v198
    %202 = vmatprep.subr.bf16.mxu0 0
    %203 = vmatpush1.bf16.msra.mxu0 0
    %204 = vmatprep.subr.bf16.mxu0 0
    %205 = vmatpush1.bf16.msra.mxu0 0
    %206 = vmatprep.subr.bf16.mxu0 0
    %207 = vmatpush1.bf16.msra.mxu0 0
    %208 = vmatprep.subr.bf16.mxu0 0
    %209 = vmatpush1.bf16.msra.mxu0 0
    %210 = vmatprep.subr.bf16.mxu0 0
    %211 = vmatpush1.bf16.msra.mxu0 0
    %212 = vmatprep.subr.bf16.mxu0 0
    %213 = vmatpush1.bf16.msra.mxu0 0
    %214 = vmatprep.subr.bf16.mxu0 0
    %215 = vmatpush1.bf16.msra.mxu0 0
    %216 = vmatprep.subr.bf16.mxu0 0
    %217 = vmatpush1.bf16.msra.mxu0 0
    %218 = vmatprep.subr.bf16.mxu0 0
    %219 = vmatpush1.bf16.msra.mxu0 0
    %220 = vmatprep.subr.bf16.mxu0 0
    %221 = vmatpush1.bf16.msra.mxu0 0
    %222 = vmatprep.subr.bf16.mxu0 0
    %223 = vmatpush1.bf16.msra.mxu0 0
    %224 = vmatprep.subr.bf16.mxu0 0
    %225 = vmatpush1.bf16.msra.mxu0 0
    %226 = vmatprep.subr.bf16.mxu0 0
    %227 = vmatpush1.bf16.msra.mxu0 0
    %228 = vmatprep.subr.bf16.mxu0 0
    %229 = vmatpush1.bf16.msra.mxu0 0
    %230 = vmatprep.subr.bf16.mxu0 0
    %231 = vmatpush1.bf16.msra.mxu0 0
    %232 = vmatprep.mubr.bf16.mxu0 0
    %233 = vmatmul.mubr.bf16.gmra.mrb[0].mxu0 %v38
    %v234 = vpop.f32.mrb[0].mxu0
    %v235 = vadd.f32 0.0, %v234
    %v236 = vpop.f32.mrb[0].mxu0
    %v237 = vpop.f32.mrb[0].mxu0
    %v238 = vadd.f32 0.0, %v237
    %v239 = vpop.f32.mrb[0].mxu0
    %240 = vdwg.mxu0
    %v241 = vpack.c.bf16 %v238, %v235
    %v242 = vld [vmem:[%s3 + $0x20] sm:$0xf]
    %v243 = vld [vmem:[%s3 + $0x28] sm:$0xf]
    %v244 = vld [vmem:[%s3 + $0x30] sm:$0xf]
    %v245 = vld [vmem:[%s3 + $0x38] sm:$0xf]
    %v246 = vld [vmem:[%s3 + $0x40] sm:$0xf]
    %v247 = vld [vmem:[%s3 + $0x48] sm:$0xf]
    %v248 = vld [vmem:[%s3 + $0x50] sm:$0xf]
    %v249 = vld [vmem:[%s3 + $0x58] sm:$0xf]
    %v250 = vld [vmem:[%s3 + $0x60] sm:$0xf]
    %v251 = vld [vmem:[%s3 + $0x68] sm:$0xf]
    %v252 = vld [vmem:[%s3 + $0x70] sm:$0xf]
    %v253 = vld [vmem:[%s3 + $0x78] sm:$0xf]
    %v254 = vld [vmem:[%s3 + $0x80] sm:$0xf]
    %v255 = vld [vmem:[%s3 + $0x88] sm:$0xf]
    %v256 = vld [vmem:[%s3 + $0x90] sm:$0xf]
    %v257 = vld [vmem:[%s3 + $0x98] sm:$0xf]
    %v266 = vunpack.c.l.b16 %v250
    %v267 = vunpack.c.l.b16 %v251
    %v268 = vunpack.c.l.b16 %v252
    %v269 = vunpack.c.l.b16 %v253
    %v270 = vunpack.c.l.b16 %v254
    %v271 = vunpack.c.l.b16 %v255
    %v272 = vunpack.c.l.b16 %v256
    %v273 = vunpack.c.l.b16 %v257
    %v274 = vpack.c.b16 %v267, %v266
    %v275 = vpack.c.b16 %v269, %v268
    %v276 = vpack.c.b16 %v271, %v270
    %v277 = vpack.c.b16 %v273, %v272
    %vm282 = vcmask 523264
    %v284 = vsel %vm282, %v241, 0
    %286 = vmatprep.subr.bf16.mxu0 0
    %287 = vmatpush1.bf16.msra.mxu0 %v274
    %288 = vmatprep.subr.bf16.mxu0 0
    %289 = vmatpush1.bf16.msra.mxu0 %v275
    %290 = vmatprep.subr.bf16.mxu0 0
    %291 = vmatpush1.bf16.msra.mxu0 %v276
    %292 = vmatprep.subr.bf16.mxu0 0
    %293 = vmatpush1.bf16.msra.mxu0 %v277
    %294 = vmatprep.subr.bf16.mxu0 0
    %295 = vmatpush1.bf16.msra.mxu0 0
    %296 = vmatprep.subr.bf16.mxu0 0
    %297 = vmatpush1.bf16.msra.mxu0 0
    %298 = vmatprep.subr.bf16.mxu0 0
    %299 = vmatpush1.bf16.msra.mxu0 0
    %300 = vmatprep.subr.bf16.mxu0 0
    %301 = vmatpush1.bf16.msra.mxu0 0
    %302 = vmatprep.subr.bf16.mxu0 0
    %303 = vmatpush1.bf16.msra.mxu0 0
    %304 = vmatprep.subr.bf16.mxu0 0
    %305 = vmatpush1.bf16.msra.mxu0 0
    %306 = vmatprep.subr.bf16.mxu0 0
    %307 = vmatpush1.bf16.msra.mxu0 0
    %308 = vmatprep.subr.bf16.mxu0 0
    %309 = vmatpush1.bf16.msra.mxu0 0
    %310 = vmatprep.subr.bf16.mxu0 0
    %311 = vmatpush1.bf16.msra.mxu0 0
    %312 = vmatprep.subr.bf16.mxu0 0
    %313 = vmatpush1.bf16.msra.mxu0 0
    %314 = vmatprep.subr.bf16.mxu0 0
    %315 = vmatpush1.bf16.msra.mxu0 0
    %316 = vmatprep.subr.bf16.mxu0 0
    %317 = vmatpush1.bf16.msra.mxu0 0
    %318 = vmatprep.mubr.bf16.mxu0 0
    %319 = vmatmul.mubr.bf16.gmra.mrb[0].mxu0 %v284
    %v320 = vpop.f32.mrb[0].mxu0
    %v321 = vadd.f32 0.0, %v320
    %v322 = vpop.f32.mrb[0].mxu0
    %v323 = vpop.f32.mrb[0].mxu0
    %v324 = vadd.f32 0.0, %v323
    %v325 = vpop.f32.mrb[0].mxu0
    %326 = vdwg.mxu0
    %v335 = vunpack.c.l.b16 %v242
    %v336 = vunpack.c.l.b16 %v243
    %v337 = vunpack.c.l.b16 %v244
    %v338 = vunpack.c.l.b16 %v245
    %v339 = vunpack.c.l.b16 %v246
    %v340 = vunpack.c.l.b16 %v247
    %v341 = vunpack.c.l.b16 %v248
    %v342 = vunpack.c.l.b16 %v249
    %v343 = vpack.c.b16 %v336, %v335
    %v344 = vpack.c.b16 %v338, %v337
    %v345 = vpack.c.b16 %v340, %v339
    %v346 = vpack.c.b16 %v342, %v341
    %v351 = vsel %vm282, %v196, 0
    %353 = vmatprep.subr.bf16.mxu0 0
    %354 = vmatpush1.bf16.msra.mxu0 %v343
    %355 = vmatprep.subr.bf16.mxu0 0
    %356 = vmatpush1.bf16.msra.mxu0 %v344
    %357 = vmatprep.subr.bf16.mxu0 0
    %358 = vmatpush1.bf16.msra.mxu0 %v345
    %359 = vmatprep.subr.bf16.mxu0 0
    %360 = vmatpush1.bf16.msra.mxu0 %v346
    %361 = vmatprep.subr.bf16.mxu0 0
    %362 = vmatpush1.bf16.msra.mxu0 0
    %363 = vmatprep.subr.bf16.mxu0 0
    %364 = vmatpush1.bf16.msra.mxu0 0
    %365 = vmatprep.subr.bf16.mxu0 0
    %366 = vmatpush1.bf16.msra.mxu0 0
    %367 = vmatprep.subr.bf16.mxu0 0
    %368 = vmatpush1.bf16.msra.mxu0 0
    %369 = vmatprep.subr.bf16.mxu0 0
    %370 = vmatpush1.bf16.msra.mxu0 0
    %371 = vmatprep.subr.bf16.mxu0 0
    %372 = vmatpush1.bf16.msra.mxu0 0
    %373 = vmatprep.subr.bf16.mxu0 0
    %374 = vmatpush1.bf16.msra.mxu0 0
    %375 = vmatprep.subr.bf16.mxu0 0
    %376 = vmatpush1.bf16.msra.mxu0 0
    %377 = vmatprep.subr.bf16.mxu0 0
    %378 = vmatpush1.bf16.msra.mxu0 0
    %379 = vmatprep.subr.bf16.mxu0 0
    %380 = vmatpush1.bf16.msra.mxu0 0
    %381 = vmatprep.subr.bf16.mxu0 0
    %382 = vmatpush1.bf16.msra.mxu0 0
    %383 = vmatprep.subr.bf16.mxu0 0
    %384 = vmatpush1.bf16.msra.mxu0 0
    %385 = vmatprep.mubr.bf16.mxu0 0
    %386 = vmatmul.mubr.bf16.gmra.mrb[0].mxu0 %v351
    %v387 = vpop.f32.mrb[0].mxu0
    %v388 = vadd.f32 %v321, %v387
    %v389 = vpop.f32.mrb[0].mxu0
    %v390 = vpop.f32.mrb[0].mxu0
    %v391 = vadd.f32 %v324, %v390
    %v392 = vpop.f32.mrb[0].mxu0
    %393 = vdwg.mxu0
    %v394 = vlaneseq
    %v395 = vshrl.u32 %v394, 7
    %v396 = vsub.s32 1, %v395
    %v397 = vrot.slane %v187, %v396
    %v398 = vadd.f32 %v388, %v397
    %v399 = vadd.f32 %v391, %v397
    %v400 = vmax.f32 %v398, 0.0
    %v401 = vmax.f32 %v399, 0.0
    %v402 = vpack.c.bf16 %v401, %v400
    %v403 = vld [vmem:[%s3 + $0xa0] sm:$0xff]
    %v404 = vld [vmem:[%s3 + $0xa8] sm:$0xff]
    %v405 = vld [vmem:[%s3 + $0xb0] sm:$0xff]
    %v406 = vld [vmem:[%s3 + $0xb8] sm:$0xff]
    %v407 = vld [vmem:[%s3 + $0xc0] sm:$0xff]
    %v408 = vld [vmem:[%s3 + $0xc8] sm:$0xff]
    %v409 = vld [vmem:[%s3 + $0xd0] sm:$0xff]
    %v410 = vld [vmem:[%s3 + $0xd8] sm:$0xff]
    %v411 = vld [vmem:[%s4] sm:$0x22]
    %v412 = vunpack.c.l.bf16 %v411
    %v413 = vunpack.c.h.bf16 %v411
    %v414 = vlaneseq
    %v415 = vshrl.u32 %v414, 7
    %v416 = vsub.s32 2, %v415
    %v417 = vrot.slane %v412, %v416
    %v418 = vlaneseq
    %v419 = vshrl.u32 %v418, 7
    %v420 = vsub.s32 2, %v419
    %v421 = vrot.slane %v413, %v420
    %v430 = vunpack.c.l.b16 %v403
    %v431 = vunpack.c.h.b16 %v403
    %v432 = vunpack.c.l.b16 %v404
    %v433 = vunpack.c.h.b16 %v404
    %v434 = vunpack.c.l.b16 %v405
    %v435 = vunpack.c.h.b16 %v405
    %v436 = vunpack.c.l.b16 %v406
    %v437 = vunpack.c.h.b16 %v406
    %v438 = vunpack.c.l.b16 %v407
    %v439 = vunpack.c.h.b16 %v407
    %v440 = vunpack.c.l.b16 %v408
    %v441 = vunpack.c.h.b16 %v408
    %v442 = vunpack.c.l.b16 %v409
    %v443 = vunpack.c.h.b16 %v409
    %v444 = vunpack.c.l.b16 %v410
    %v445 = vunpack.c.h.b16 %v410
    %v446 = vpack.c.b16 %v432, %v430
    %v447 = vpack.c.b16 %v433, %v431
    %v448 = vpack.c.b16 %v436, %v434
    %v449 = vpack.c.b16 %v437, %v435
    %v450 = vpack.c.b16 %v440, %v438
    %v451 = vpack.c.b16 %v441, %v439
    %v452 = vpack.c.b16 %v444, %v442
    %v453 = vpack.c.b16 %v445, %v443
    %v463 = vsel %vm282, %v402, 0
    %465 = vmatprep.subr.bf16.mxu0 %v447
    %466 = vmatpush1.bf16.msra.mxu0 %v446
    %467 = vmatprep.subr.bf16.mxu0 %v449
    %468 = vmatpush1.bf16.msra.mxu0 %v448
    %469 = vmatprep.subr.bf16.mxu0 %v451
    %470 = vmatpush1.bf16.msra.mxu0 %v450
    %471 = vmatprep.subr.bf16.mxu0 %v453
    %472 = vmatpush1.bf16.msra.mxu0 %v452
    %473 = vmatprep.subr.bf16.mxu0 0
    %474 = vmatpush1.bf16.msra.mxu0 0
    %475 = vmatprep.subr.bf16.mxu0 0
    %476 = vmatpush1.bf16.msra.mxu0 0
    %477 = vmatprep.subr.bf16.mxu0 0
    %478 = vmatpush1.bf16.msra.mxu0 0
    %479 = vmatprep.subr.bf16.mxu0 0
    %480 = vmatpush1.bf16.msra.mxu0 0
    %481 = vmatprep.subr.bf16.mxu0 0
    %482 = vmatpush1.bf16.msra.mxu0 0
    %483 = vmatprep.subr.bf16.mxu0 0
    %484 = vmatpush1.bf16.msra.mxu0 0
    %485 = vmatprep.subr.bf16.mxu0 0
    %486 = vmatpush1.bf16.msra.mxu0 0
    %487 = vmatprep.subr.bf16.mxu0 0
    %488 = vmatpush1.bf16.msra.mxu0 0
    %489 = vmatprep.subr.bf16.mxu0 0
    %490 = vmatpush1.bf16.msra.mxu0 0
    %491 = vmatprep.subr.bf16.mxu0 0
    %492 = vmatpush1.bf16.msra.mxu0 0
    %493 = vmatprep.subr.bf16.mxu0 0
    %494 = vmatpush1.bf16.msra.mxu0 0
    %495 = vmatprep.subr.bf16.mxu0 0
    %496 = vmatpush1.bf16.msra.mxu0 0
    %497 = vmatprep.mubr.bf16.mxu0 0
    %498 = vmatmul.mubr.bf16.gmra.mrb[0].mxu0 %v463
    %v499 = vpop.f32.mrb[0].mxu0
    %v500 = vadd.f32 %v417, %v499
    %v501 = vpop.f32.mrb[0].mxu0
    %v502 = vadd.f32 %v421, %v501
    %v503 = vpop.f32.mrb[0].mxu0
    %v504 = vadd.f32 %v417, %v503
    %v505 = vpop.f32.mrb[0].mxu0
    %v506 = vadd.f32 %v421, %v505
    %507 = vdwg.mxu0
    %v508 = vxor.u32 %v500, 2147483648
    %v509 = vxor.u32 %v504, 2147483648
    %v510 = vmul.f32 %v508, 1.442695
    %v511 = vpow.pop %v510
    %v512 = vmul.f32 %v509, 1.442695
    %v513 = vpow.pop %v512
    %v514 = vadd.f32 %v511, 1.0
    %v515 = vadd.f32 %v513, 1.0
    %v516 = vrcp.pop %v514
    %v517 = vmul.f32 1.0, %v516
    %v518 = vrcp.pop %v515
    %v519 = vmul.f32 1.0, %v518
    %v520 = vtanh.pop %v500
    %v521 = vtanh.pop %v504
    %v522 = vxor.u32 %v502, 2147483648
    %v523 = vxor.u32 %v506, 2147483648
    %v524 = vmul.f32 %v522, 1.442695
    %v525 = vpow.pop %v524
    %v526 = vmul.f32 %v523, 1.442695
    %v527 = vpow.pop %v526
    %v528 = vadd.f32 %v525, 1.0
    %v529 = vadd.f32 %v527, 1.0
    %v530 = vrcp.pop %v528
    %v531 = vmul.f32 1.0, %v530
    %v532 = vrcp.pop %v529
    %v533 = vmul.f32 1.0, %v532
    %536 = vrot.lane.b32.xlu0 %v520, 64
    %v537 = vpop.permute.xlu0 %536
    %538 = vrot.lane.b32.xlu0 %v521, 64
    %v539 = vpop.permute.xlu0 %538
    %v542 = vmul.f32 %v517, %v537
    %v543 = vmul.f32 %v519, %v539
    %v544 = vtanh.pop %v542
    %v545 = vtanh.pop %v543
    %v546 = vmul.f32 %v531, %v544
    %v547 = vmul.f32 %v533, %v545
    %v548 = vpack.c.bf16 %v547, %v546
    %v549 = vld [vmem:[%s3 + $0xe0] sm:$0xff]
    %v550 = vld [vmem:[%s3 + $0xe8] sm:$0xff]
    %v551 = vld [vmem:[%s3 + $0xf0] sm:$0xff]
    %v552 = vld [vmem:[%s3 + $0xf8] sm:$0xff]
    %v553 = vld [vmem:[%s3 + $0x100] sm:$0xff]
    %v554 = vld [vmem:[%s3 + $0x108] sm:$0xff]
    %v555 = vld [vmem:[%s3 + $0x110] sm:$0xff]
    %v556 = vld [vmem:[%s3 + $0x118] sm:$0xff]
    %v557 = vlaneseq
    %v558 = vshrl.u32 %v557, 7
    %v559 = vsub.s32 3, %v558
    %v560 = vrot.slane %v412, %v559
    %v561 = vlaneseq
    %v562 = vshrl.u32 %v561, 7
    %v563 = vsub.s32 3, %v562
    %v564 = vrot.slane %v413, %v563
    %v573 = vunpack.c.l.b16 %v549
    %v574 = vunpack.c.h.b16 %v549
    %v575 = vunpack.c.l.b16 %v550
    %v576 = vunpack.c.h.b16 %v550
    %v577 = vunpack.c.l.b16 %v551
    %v578 = vunpack.c.h.b16 %v551
    %v579 = vunpack.c.l.b16 %v552
    %v580 = vunpack.c.h.b16 %v552
    %v581 = vunpack.c.l.b16 %v553
    %v582 = vunpack.c.h.b16 %v553
    %v583 = vunpack.c.l.b16 %v554
    %v584 = vunpack.c.h.b16 %v554
    %v585 = vunpack.c.l.b16 %v555
    %v586 = vunpack.c.h.b16 %v555
    %v587 = vunpack.c.l.b16 %v556
    %v588 = vunpack.c.h.b16 %v556
    %v589 = vpack.c.b16 %v575, %v573
    %v590 = vpack.c.b16 %v576, %v574
    %v591 = vpack.c.b16 %v579, %v577
    %v592 = vpack.c.b16 %v580, %v578
    %v593 = vpack.c.b16 %v583, %v581
    %v594 = vpack.c.b16 %v584, %v582
    %v595 = vpack.c.b16 %v587, %v585
    %v596 = vpack.c.b16 %v588, %v586
    %v606 = vsel %vm282, %v548, 0
    %608 = vmatprep.subr.bf16.mxu0 %v590
    %609 = vmatpush1.bf16.msra.mxu0 %v589
    %610 = vmatprep.subr.bf16.mxu0 %v592
    %611 = vmatpush1.bf16.msra.mxu0 %v591
    %612 = vmatprep.subr.bf16.mxu0 %v594
    %613 = vmatpush1.bf16.msra.mxu0 %v593
    %614 = vmatprep.subr.bf16.mxu0 %v596
    %615 = vmatpush1.bf16.msra.mxu0 %v595
    %616 = vmatprep.subr.bf16.mxu0 0
    %617 = vmatpush1.bf16.msra.mxu0 0
    %618 = vmatprep.subr.bf16.mxu0 0
    %619 = vmatpush1.bf16.msra.mxu0 0
    %620 = vmatprep.subr.bf16.mxu0 0
    %621 = vmatpush1.bf16.msra.mxu0 0
    %622 = vmatprep.subr.bf16.mxu0 0
    %623 = vmatpush1.bf16.msra.mxu0 0
    %624 = vmatprep.subr.bf16.mxu0 0
    %625 = vmatpush1.bf16.msra.mxu0 0
    %626 = vmatprep.subr.bf16.mxu0 0
    %627 = vmatpush1.bf16.msra.mxu0 0
    %628 = vmatprep.subr.bf16.mxu0 0
    %629 = vmatpush1.bf16.msra.mxu0 0
    %630 = vmatprep.subr.bf16.mxu0 0
    %631 = vmatpush1.bf16.msra.mxu0 0
    %632 = vmatprep.subr.bf16.mxu0 0
    %633 = vmatpush1.bf16.msra.mxu0 0
    %634 = vmatprep.subr.bf16.mxu0 0
    %635 = vmatpush1.bf16.msra.mxu0 0
    %636 = vmatprep.subr.bf16.mxu0 0
    %637 = vmatpush1.bf16.msra.mxu0 0
    %638 = vmatprep.subr.bf16.mxu0 0
    %639 = vmatpush1.bf16.msra.mxu0 0
    %640 = vmatprep.mubr.bf16.mxu0 0
    %641 = vmatmul.mubr.bf16.gmra.mrb[0].mxu0 %v606
    %v642 = vpop.f32.mrb[0].mxu0
    %v643 = vadd.f32 %v560, %v642
    %v644 = vpop.f32.mrb[0].mxu0
    %v645 = vadd.f32 %v564, %v644
    %v646 = vpop.f32.mrb[0].mxu0
    %v647 = vadd.f32 %v560, %v646
    %v648 = vpop.f32.mrb[0].mxu0
    %v649 = vadd.f32 %v564, %v648
    %650 = vdwg.mxu0
    %v651 = vxor.u32 %v643, 2147483648
    %v652 = vxor.u32 %v647, 2147483648
    %v653 = vmul.f32 %v651, 1.442695
    %v654 = vpow.pop %v653
    %v655 = vmul.f32 %v652, 1.442695
    %v656 = vpow.pop %v655
    %v657 = vadd.f32 %v654, 1.0
    %v658 = vadd.f32 %v656, 1.0
    %v659 = vrcp.pop %v657
    %v660 = vmul.f32 1.0, %v659
    %v661 = vrcp.pop %v658
    %v662 = vmul.f32 1.0, %v661
    %v663 = vtanh.pop %v643
    %v664 = vtanh.pop %v647
    %v665 = vxor.u32 %v645, 2147483648
    %v666 = vxor.u32 %v649, 2147483648
    %v667 = vmul.f32 %v665, 1.442695
    %v668 = vpow.pop %v667
    %v669 = vmul.f32 %v666, 1.442695
    %v670 = vpow.pop %v669
    %v671 = vadd.f32 %v668, 1.0
    %v672 = vadd.f32 %v670, 1.0
    %v673 = vrcp.pop %v671
    %v674 = vmul.f32 1.0, %v673
    %v675 = vrcp.pop %v672
    %v676 = vmul.f32 1.0, %v675
    %679 = vrot.lane.b32.xlu0 %v663, 64
    %v680 = vpop.permute.xlu0 %679
    %681 = vrot.lane.b32.xlu0 %v664, 64
    %v682 = vpop.permute.xlu0 %681
    %v685 = vmul.f32 %v660, %v680
    %v686 = vmul.f32 %v662, %v682
    %v687 = vtanh.pop %v685
    %v688 = vtanh.pop %v686
    %v689 = vmul.f32 %v674, %v687
    %v690 = vmul.f32 %v676, %v688
    %v691 = vld [vmem:[%s1] sm:$0x1]
    %v692 = vpack.c.bf16 %v690, %v689
    %v694 = vsel %vm36, %v691, 0
    %v697 = vsel %vm40, %v692, 0
    %699 = vmatprep.subr.bf16.mxu0 0
    %700 = vmatpush1.bf16.msra.mxu0 %v697
    %701 = vmatprep.subr.bf16.mxu0 0
    %702 = vmatpush1.bf16.msra.mxu0 0
    %703 = vmatprep.subr.bf16.mxu0 0
    %704 = vmatpush1.bf16.msra.mxu0 0
    %705 = vmatprep.subr.bf16.mxu0 0
    %706 = vmatpush1.bf16.msra.mxu0 0
    %707 = vmatprep.subr.bf16.mxu0 0
    %708 = vmatpush1.bf16.msra.mxu0 0
    %709 = vmatprep.subr.bf16.mxu0 0
    %710 = vmatpush1.bf16.msra.mxu0 0
    %711 = vmatprep.subr.bf16.mxu0 0
    %712 = vmatpush1.bf16.msra.mxu0 0
    %713 = vmatprep.subr.bf16.mxu0 0
    %714 = vmatpush1.bf16.msra.mxu0 0
    %715 = vmatprep.subr.bf16.mxu0 0
    %716 = vmatpush1.bf16.msra.mxu0 0
    %717 = vmatprep.subr.bf16.mxu0 0
    %718 = vmatpush1.bf16.msra.mxu0 0
    %719 = vmatprep.subr.bf16.mxu0 0
    %720 = vmatpush1.bf16.msra.mxu0 0
    %721 = vmatprep.subr.bf16.mxu0 0
    %722 = vmatpush1.bf16.msra.mxu0 0
    %723 = vmatprep.subr.bf16.mxu0 0
    %724 = vmatpush1.bf16.msra.mxu0 0
    %725 = vmatprep.subr.bf16.mxu0 0
    %726 = vmatpush1.bf16.msra.mxu0 0
    %727 = vmatprep.subr.bf16.mxu0 0
    %728 = vmatpush1.bf16.msra.mxu0 0
    %729 = vmatprep.subr.bf16.mxu0 0
    %730 = vmatpush1.bf16.msra.mxu0 0
    %731 = vmatprep.mubr.bf16.mxu0 0
    %732 = vmatmul.mubr.bf16.gmra.mrb[0].mxu0 %v694
    %v733 = vpop.f32.mrb[0].mxu0
    %v734 = vadd.f32 0.0, %v733
    %v735 = vpop.f32.mrb[0].mxu0
    %v736 = vpop.f32.mrb[0].mxu0
    %v737 = vpop.f32.mrb[0].mxu0
    %738 = vdwg.mxu0
    %v739 = vpack.c.bf16 %v734, %v734
    %v740 = vld [vmem:[%s3 + $0x120] sm:$0xf]
    %v741 = vld [vmem:[%s3 + $0x128] sm:$0xf]
    %v742 = vld [vmem:[%s3 + $0x130] sm:$0xf]
    %v743 = vld [vmem:[%s3 + $0x138] sm:$0xf]
    %v744 = vld [vmem:[%s3 + $0x140] sm:$0xf]
    %v745 = vld [vmem:[%s3 + $0x148] sm:$0xf]
    %v746 = vld [vmem:[%s3 + $0x150] sm:$0xf]
    %v747 = vld [vmem:[%s3 + $0x158] sm:$0xf]
    %v748 = vld [vmem:[%s4] sm:$0x4]
    %v749 = vunpack.c.l.bf16 %v748
    %v758 = vunpack.c.l.b16 %v740
    %v759 = vunpack.c.l.b16 %v741
    %v760 = vunpack.c.l.b16 %v742
    %v761 = vunpack.c.l.b16 %v743
    %v762 = vunpack.c.l.b16 %v744
    %v763 = vunpack.c.l.b16 %v745
    %v764 = vunpack.c.l.b16 %v746
    %v765 = vunpack.c.l.b16 %v747
    %v766 = vpack.c.b16 %v759, %v758
    %v767 = vpack.c.b16 %v761, %v760
    %v768 = vpack.c.b16 %v763, %v762
    %v769 = vpack.c.b16 %v765, %v764
    %v775 = vrot.slane %v749, 4
    %v778 = vsel %vm282, %v739, 0
    %780 = vmatprep.subr.bf16.mxu0 0
    %781 = vmatpush1.bf16.msra.mxu0 %v766
    %782 = vmatprep.subr.bf16.mxu0 0
    %783 = vmatpush1.bf16.msra.mxu0 %v767
    %784 = vmatprep.subr.bf16.mxu0 0
    %785 = vmatpush1.bf16.msra.mxu0 %v768
    %786 = vmatprep.subr.bf16.mxu0 0
    %787 = vmatpush1.bf16.msra.mxu0 %v769
    %788 = vmatprep.subr.bf16.mxu0 0
    %789 = vmatpush1.bf16.msra.mxu0 0
    %790 = vmatprep.subr.bf16.mxu0 0
    %791 = vmatpush1.bf16.msra.mxu0 0
    %792 = vmatprep.subr.bf16.mxu0 0
    %793 = vmatpush1.bf16.msra.mxu0 0
    %794 = vmatprep.subr.bf16.mxu0 0
    %795 = vmatpush1.bf16.msra.mxu0 0
    %796 = vmatprep.subr.bf16.mxu0 0
    %797 = vmatpush1.bf16.msra.mxu0 0
    %798 = vmatprep.subr.bf16.mxu0 0
    %799 = vmatpush1.bf16.msra.mxu0 0
    %800 = vmatprep.subr.bf16.mxu0 0
    %801 = vmatpush1.bf16.msra.mxu0 0
    %802 = vmatprep.subr.bf16.mxu0 0
    %803 = vmatpush1.bf16.msra.mxu0 0
    %804 = vmatprep.subr.bf16.mxu0 0
    %805 = vmatpush1.bf16.msra.mxu0 0
    %806 = vmatprep.subr.bf16.mxu0 0
    %807 = vmatpush1.bf16.msra.mxu0 0
    %808 = vmatprep.subr.bf16.mxu0 0
    %809 = vmatpush1.bf16.msra.mxu0 0
    %810 = vmatprep.subr.bf16.mxu0 0
    %811 = vmatpush1.bf16.msra.mxu0 0
    %812 = vmatprep.mubr.bf16.mxu0 0
    %813 = vmatmul.mubr.bf16.gmra.mrb[0].mxu0 %v778
    %v814 = vpop.f32.mrb[0].mxu0
    %v815 = vadd.f32 %v775, %v814
    %v816 = vpop.f32.mrb[0].mxu0
    %v817 = vpop.f32.mrb[0].mxu0
    %v818 = vpop.f32.mrb[0].mxu0
    %819 = vdwg.mxu0
    %vm820 = vcmask 8192
    %v821 = vsel %vm820, %v815, -inf
    %822 = vmax.xlane.f32.xlu0 %v821
    %v823 = vpop.xlane.xlu0 %822
    %v824 = vsub.f32 %v815, %v823
    %v825 = vmul.f32 %v824, 1.442695
    %v826 = vpow.pop %v825
    %v827 = vsel %vm820, %v826, 0.0
    %828 = vadd.xlane.f32.xlu0 %v827
    %v829 = vpop.xlane.xlu0 %828
    %v830 = vlog2.pop %v829
    %v831 = vmul.f32 %v830, 0.6931472
    %v832 = vadd.f32 %v823, %v831
    %v833 = vsub.f32 %v815, %v832
    %834 = vst [vmem:[#allocation2] sm:$0x1] %v833
    // Predicated region
    $region22: #{dcrnn_forward.1} parent=1 // pred_check
      _
    $region23: #{dcrnn_forward.1} parent=1 // pred_check_branch
      %836 = sbr.rel (0) target = $region25
    $region24: #{dcrnn_forward.1} parent=1 // pred_region
      %s838 = ssub.s32 16, 16
      %839 = vsyncadd [#allocation3], %s838
      %s841 = sshll.u32 [#allocation2], 4
      %s842 = int_to_ptr.vmem [resolvable:$true] %s841
      %844 = dma.vmem_to_hbm [thread:$0]  %s842, 16, %s5, [#allocation3]
    $region25: #{dcrnn_forward.1} parent=1 // pred_fallthru
      _
    // Predicated region
    $region26: #{dcrnn_forward.1} parent=1 // pred_check
      _
    $region27: #{dcrnn_forward.1} parent=1 // pred_check_branch
      %846 = sbr.rel (0) target = $region29
    $region28: #{dcrnn_forward.1} parent=1 // pred_region
      %847 = dma.done [#allocation3], 16
    $region29: #{dcrnn_forward.1} parent=1 // pred_fallthru
      _
    %848 = vsyncpa [#allocation3], 1

</llo_original>
